<compile_context>
chip_gen: v6e
topology: v6e:2x2x1
jax: 0.10.0
libtpu: 0.0.40
codegen_flags: <defaults>
</compile_context>

<pallas_src>
import jax
import jax.numpy as jnp
from jax.experimental import pallas as pl
from jax.experimental.pallas import tpu as pltpu

LANE = 128
SUBLANE = 8


def _round_up(v, m):
    return -(-v // m) * m


def _make_kernel(din, use_vpu_first_layer):
    def kernel(act_ref,                     # SMEM (3,): [c, a, lamb]  (scalar prefetch)
               x_ref,                       # (din, tb)    feature-major input tile
               w_in_ref, b_in_ref,          # (dh, din), (dh, 1)
               w_h0_ref, b_h0_ref,          # (dh, dh),  (dh, 1)
               w_h1_ref, b_h1_ref,          # (dh, dh),  (dh, 1)
               w_out_ref, b_out_ref,        # (dout_p, dh), (dout_p, 1)
               o_ref):                      # (dout_p, tb)
        # Read the activation scalars once (JAX does not CSE splats) and fold lamb*a.
        c = act_ref[0]
        lamb = act_ref[2]
        lamb_a = lamb * act_ref[1]

        def split_tanh(h):
            # tanh rides the EUP slot; the mul/sub/add ride the VPU.
            return h + c * jnp.tanh(h * lamb - lamb_a)

        x_t = x_ref[...]                                    # (din, tb)

        # ---- fc_in : h = W_in^T x^T + b ---------------------------------------
        if use_vpu_first_layer:
            # K = din is tiny: unrolled broadcast-FMA "outer products" on the VPU.
            w_in = w_in_ref[...]
            h = b_in_ref[...] + w_in[:, 0:1] * x_t[0:1, :]
            for k in range(1, din):
                h = h + w_in[:, k:k + 1] * x_t[k:k + 1, :]
        else:
            h = jnp.dot(w_in_ref[...], x_t,
                        preferred_element_type=jnp.float32) + b_in_ref[...]
        h = split_tanh(h)

        # ---- hiddens[0] + activation (MXU has large slack at dh=32) ------------
        h = jnp.dot(w_h0_ref[...], h,
                    preferred_element_type=jnp.float32) + b_h0_ref[...]
        h = split_tanh(h)

        # ---- hiddens[1] + ReLU ---------------------------------------------------
        h = jnp.dot(w_h1_ref[...], h,
                    preferred_element_type=jnp.float32) + b_h1_ref[...]
        h = jnp.maximum(h, 0.0)

        # ---- fc_out (dout padded to 8 sublanes -> 4x, not 64x, write amp) -------
        y = jnp.dot(w_out_ref[...], h,
                    preferred_element_type=jnp.float32) + b_out_ref[...]
        o_ref[...] = y.astype(o_ref.dtype)

    return kernel


def prepare_params(params):
    """One-time param prep: feature-major (out, in) weights + sublane-padded fc_out."""
    dout = params["w_out"].shape[1]
    dout_p = _round_up(dout, SUBLANE)
    w_out_t = jnp.pad(params["w_out"].T, ((0, dout_p - dout), (0, 0)))
    b_out_t = jnp.pad(params["b_out"].reshape(-1, 1), ((0, dout_p - dout), (0, 0)))
    return {
        "act": params["act"],
        "w_in_t": params["w_in"].T,  "b_in_t": params["b_in"].reshape(-1, 1),
        "w_h0_t": params["w_h0"].T,  "b_h0_t": params["b_h0"].reshape(-1, 1),
        "w_h1_t": params["w_h1"].T,  "b_h1_t": params["b_h1"].reshape(-1, 1),
        "w_out_t": w_out_t,          "b_out_t": b_out_t,
        "dout": int(dout),
    }


def classifier_al_forward(x, kp, *, tb=None):
    B, din = x.shape
    dh = kp["w_in_t"].shape[0]
    dout_p = kp["w_out_t"].shape[0]
    dout = kp["dout"]

    # ---- batch tiling: the batch sits on the LANE axis -> tiles are multiples of 128.
    # One fat tile up to 4096 rows; above that, an even number (>=2) of grid steps so
    # v7x's two TensorCores split the "parallel" axis evenly. VMEM stays tiny (<2 MiB).
    cap = 4096
    if tb is None:
        b128 = _round_up(B, LANE)
        if b128 <= cap:
            tb = b128
        else:
            nsteps = pl.cdiv(b128, cap)
            nsteps += nsteps % 2                       # even step count for v7x's 2 TCs
            tb = _round_up(pl.cdiv(b128, nsteps), LANE)
    else:
        tb = max(LANE, _round_up(tb, LANE))
    Bp = _round_up(B, tb)

    # Feature-major input; the ragged-batch pad rides the same XLA copy as the transpose.
    x_t = x.T
    if Bp != B:
        x_t = jnp.pad(x_t, ((0, 0), (0, Bp - B)))

    grid = (Bp // tb,)
    kernel = _make_kernel(din, use_vpu_first_layer=(din <= 8))

    def resident(shape):
        # weights / biases: same block every grid step (stay resident in VMEM)
        return pl.BlockSpec(shape, lambda i, act: (0, 0))

    cost = pl.CostEstimate(
        flops=2 * Bp * (din * dh + 2 * dh * dh + dh * dout_p),
        transcendentals=2 * Bp * dh,
        bytes_accessed=4 * (Bp * din + Bp * dout_p
                            + dh * (din + 2 * dh + dout_p) + 3 * dh + dout_p),
    )

    # NOTE: weight BlockSpecs could take pipeline_mode=pl.Buffered(1) to skip
    # double-buffering of resident blocks; skipped — the VMEM saving is ~tens of KiB.
    out_t = pl.pallas_call(
        kernel,
        out_shape=jax.ShapeDtypeStruct((dout_p, Bp), jnp.float32),
        grid_spec=pltpu.PrefetchScalarGridSpec(
            num_scalar_prefetch=1,                                # [c, a, lamb] -> SMEM
            grid=grid,
            in_specs=[
                pl.BlockSpec((din, tb), lambda i, act: (0, i)),   # x tile (feature-major)
                resident((dh, din)), resident((dh, 1)),           # fc_in
                resident((dh, dh)),  resident((dh, 1)),           # hiddens[0]
                resident((dh, dh)),  resident((dh, 1)),           # hiddens[1]
                resident((dout_p, dh)), resident((dout_p, 1)),    # fc_out (sublane-padded)
            ],
            out_specs=pl.BlockSpec((dout_p, tb), lambda i, act: (0, i)),
        ),
        compiler_params=pltpu.CompilerParams(
            dimension_semantics=("parallel",)),
        cost_estimate=cost,
    )(kp["act"], x_t,
      kp["w_in_t"], kp["b_in_t"],
      kp["w_h0_t"], kp["b_h0_t"],
      kp["w_h1_t"], kp["b_h1_t"],
      kp["w_out_t"], kp["b_out_t"])

    return out_t[:dout, :B].T


def _xavier_uniform(key, fan_in, fan_out):
    bound = (6.0 / (fan_in + fan_out)) ** 0.5
    return jax.random.uniform(key, (fan_in, fan_out), jnp.float32, -bound, bound)


def make_params(key, din, dh, dout):
    ks = jax.random.split(key, 6)
    # split_tanh params: c ~ U[0,1), a ~ N(0,1), lamb = 10.0 (shared module instance)
    c = jax.random.uniform(ks[0], (), jnp.float32)
    a = jax.random.normal(ks[1], (), jnp.float32)
    lamb = jnp.float32(10.0)
    return {
        "act": jnp.stack([c, a, lamb]).astype(jnp.float32),
        # Linear weights stored (in, out); biases zero-init (as in the module).
        "w_in":  _xavier_uniform(ks[2], din, dh),  "b_in":  jnp.zeros((1, dh), jnp.float32),
        "w_h0":  _xavier_uniform(ks[3], dh, dh),   "b_h0":  jnp.zeros((1, dh), jnp.float32),
        "w_h1":  _xavier_uniform(ks[4], dh, dh),   "b_h1":  jnp.zeros((1, dh), jnp.float32),
        "w_out": _xavier_uniform(ks[5], dh, dout), "b_out": jnp.zeros((1, dout), jnp.float32),
    }


def reference_forward(x, p):
    c, a, lamb = p["act"][0], p["act"][1], p["act"][2]
    act = lambda h: h + c * jnp.tanh(lamb * (h - a))
    h = act(x @ p["w_in"] + p["b_in"])
    h = act(h @ p["w_h0"] + p["b_h0"])
    h = jnp.maximum(h @ p["w_h1"] + p["b_h1"], 0.0)
    return h @ p["w_out"] + p["b_out"]


# TODO(synk): non-default configs (batch_norm=True, 'split_sign'/'split_sincos'/'relu'
# activations) are not implemented; defaults of the PyTorch module are covered.

if __name__ == "__main__":
    key = jax.random.PRNGKey(0)
    k_param, k_x1, k_x2 = jax.random.split(key, 3)

    B, DIN, DH, DOUT = 16, 4, 32, 2   # batch, dim_of_in, dim_of_hidden, output logits
    params = make_params(k_param, DIN, DH, DOUT)
    kparams = prepare_params(params)   # one-time weight transpose / pad

    # Case 1: small batch (single grid step).
    x = jax.random.normal(k_x1, (B, DIN), jnp.float32)
    y = classifier_al_forward(x, kparams)
    jax.block_until_ready(y)
    y_ref = reference_forward(x, params)
    assert y.shape == (B, DOUT)
    assert jnp.allclose(y, y_ref, atol=1e-5, rtol=1e-5)

    # Case 2: ragged batch (exercises the lane-pad path).
    B2 = 50
    x2 = jax.random.normal(k_x2, (B2, DIN), jnp.float32)
    y2 = classifier_al_forward(x2, kparams)
    jax.block_until_ready(y2)
    y2_ref = reference_forward(x2, params)
    assert y2.shape == (B2, DOUT)
    assert jnp.allclose(y2, y2_ref, atol=1e-5, rtol=1e-5)

    print("KERNEL_OK")
</pallas_src>

<mosaic_0001>
module attributes {stable_mosaic.version = 11 : i64} {
  func.func @kernel(%arg0: i32, %arg1: memref<3xf32, #tpu.memory_space<smem>>, %arg2: memref<4x128xf32, #tpu.memory_space<vmem>>, %arg3: memref<32x4xf32, #tpu.memory_space<vmem>>, %arg4: memref<32x1xf32, #tpu.memory_space<vmem>>, %arg5: memref<32x32xf32, #tpu.memory_space<vmem>>, %arg6: memref<32x1xf32, #tpu.memory_space<vmem>>, %arg7: memref<32x32xf32, #tpu.memory_space<vmem>>, %arg8: memref<32x1xf32, #tpu.memory_space<vmem>>, %arg9: memref<8x32xf32, #tpu.memory_space<vmem>>, %arg10: memref<8x1xf32, #tpu.memory_space<vmem>>, %arg11: memref<8x128xf32, #tpu.memory_space<vmem>>) attributes {dimension_semantics = [#tpu.dimension_semantics<parallel>], iteration_bounds = array<i64: 1>, scalar_prefetch = 1 : i64, scratch_operands = 0 : i64, tpu.core_type = #tpu.core_type<tc>, window_params = [{transform_indices = @transform_0, window_bounds = array<i64: 4, 128>}, {pipeline_mode = #tpu.pipeline_mode<synchronous>, transform_indices = @transform_1, window_bounds = array<i64: 32, 4>}, {pipeline_mode = #tpu.pipeline_mode<synchronous>, transform_indices = @transform_2, window_bounds = array<i64: 32, 1>}, {pipeline_mode = #tpu.pipeline_mode<synchronous>, transform_indices = @transform_3, window_bounds = array<i64: 32, 32>}, {pipeline_mode = #tpu.pipeline_mode<synchronous>, transform_indices = @transform_4, window_bounds = array<i64: 32, 1>}, {pipeline_mode = #tpu.pipeline_mode<synchronous>, transform_indices = @transform_5, window_bounds = array<i64: 32, 32>}, {pipeline_mode = #tpu.pipeline_mode<synchronous>, transform_indices = @transform_6, window_bounds = array<i64: 32, 1>}, {pipeline_mode = #tpu.pipeline_mode<synchronous>, transform_indices = @transform_7, window_bounds = array<i64: 8, 32>}, {pipeline_mode = #tpu.pipeline_mode<synchronous>, transform_indices = @transform_8, window_bounds = array<i64: 8, 1>}, {transform_indices = @transform_9, window_bounds = array<i64: 8, 128>}]} {
    %c0 = arith.constant 0 : index
    %0 = memref.load %arg1[%c0] : memref<3xf32, #tpu.memory_space<smem>>
    %c2 = arith.constant 2 : index
    %1 = memref.load %arg1[%c2] : memref<3xf32, #tpu.memory_space<smem>>
    %c1 = arith.constant 1 : index
    %2 = memref.load %arg1[%c1] : memref<3xf32, #tpu.memory_space<smem>>
    %3 = arith.mulf %1, %2 : f32
    %c0_0 = arith.constant 0 : index
    %c0_1 = arith.constant 0 : index
    %4 = vector.load %arg2[%c0_0, %c0_1] : memref<4x128xf32, #tpu.memory_space<vmem>>, vector<4x128xf32>
    %c0_2 = arith.constant 0 : index
    %c0_3 = arith.constant 0 : index
    %5 = vector.load %arg3[%c0_2, %c0_3] : memref<32x4xf32, #tpu.memory_space<vmem>>, vector<32x4xf32>
    %c0_4 = arith.constant 0 : index
    %c0_5 = arith.constant 0 : index
    %6 = vector.load %arg4[%c0_4, %c0_5] : memref<32x1xf32, #tpu.memory_space<vmem>>, vector<32x1xf32>
    %7 = vector.extract_strided_slice %5 {offsets = [0, 0], sizes = [32, 1], strides = [1, 1]} : vector<32x4xf32> to vector<32x1xf32>
    %8 = vector.extract_strided_slice %4 {offsets = [0, 0], sizes = [1, 128], strides = [1, 1]} : vector<4x128xf32> to vector<1x128xf32>
    %9 = vector.broadcast %7 : vector<32x1xf32> to vector<32x128xf32>
    %10 = vector.broadcast %8 : vector<1x128xf32> to vector<32x128xf32>
    %11 = arith.mulf %9, %10 : vector<32x128xf32>
    %12 = vector.broadcast %6 : vector<32x1xf32> to vector<32x128xf32>
    %13 = arith.addf %12, %11 : vector<32x128xf32>
    %14 = vector.extract_strided_slice %5 {offsets = [0, 1], sizes = [32, 1], strides = [1, 1]} : vector<32x4xf32> to vector<32x1xf32>
    %15 = vector.extract_strided_slice %4 {offsets = [1, 0], sizes = [1, 128], strides = [1, 1]} : vector<4x128xf32> to vector<1x128xf32>
    %16 = vector.broadcast %14 : vector<32x1xf32> to vector<32x128xf32>
    %17 = vector.broadcast %15 : vector<1x128xf32> to vector<32x128xf32>
    %18 = arith.mulf %16, %17 : vector<32x128xf32>
    %19 = arith.addf %13, %18 : vector<32x128xf32>
    %20 = vector.extract_strided_slice %5 {offsets = [0, 2], sizes = [32, 1], strides = [1, 1]} : vector<32x4xf32> to vector<32x1xf32>
    %21 = vector.extract_strided_slice %4 {offsets = [2, 0], sizes = [1, 128], strides = [1, 1]} : vector<4x128xf32> to vector<1x128xf32>
    %22 = vector.broadcast %20 : vector<32x1xf32> to vector<32x128xf32>
    %23 = vector.broadcast %21 : vector<1x128xf32> to vector<32x128xf32>
    %24 = arith.mulf %22, %23 : vector<32x128xf32>
    %25 = arith.addf %19, %24 : vector<32x128xf32>
    %26 = vector.extract_strided_slice %5 {offsets = [0, 3], sizes = [32, 1], strides = [1, 1]} : vector<32x4xf32> to vector<32x1xf32>
    %27 = vector.extract_strided_slice %4 {offsets = [3, 0], sizes = [1, 128], strides = [1, 1]} : vector<4x128xf32> to vector<1x128xf32>
    %28 = vector.broadcast %26 : vector<32x1xf32> to vector<32x128xf32>
    %29 = vector.broadcast %27 : vector<1x128xf32> to vector<32x128xf32>
    %30 = arith.mulf %28, %29 : vector<32x128xf32>
    %31 = arith.addf %25, %30 : vector<32x128xf32>
    %32 = vector.broadcast %1 : f32 to vector<32x128xf32>
    %33 = arith.mulf %31, %32 : vector<32x128xf32>
    %34 = vector.broadcast %3 : f32 to vector<32x128xf32>
    %35 = arith.subf %33, %34 : vector<32x128xf32>
    %36 = math.tanh %35 : vector<32x128xf32>
    %37 = vector.broadcast %0 : f32 to vector<32x128xf32>
    %38 = arith.mulf %37, %36 : vector<32x128xf32>
    %39 = arith.addf %31, %38 : vector<32x128xf32>
    %c0_6 = arith.constant 0 : index
    %c0_7 = arith.constant 0 : index
    %40 = vector.load %arg5[%c0_6, %c0_7] : memref<32x32xf32, #tpu.memory_space<vmem>>, vector<32x32xf32>
    %cst = arith.constant dense<0.000000e+00> : vector<32x128xf32>
    %41 = tpu.matmul %40, %39, %cst {dimension_numbers = #tpu.dot_dimension_numbers<[1], [0], [0], [1], [0, 0, 1, 1], [], []>} : vector<32x32xf32>, vector<32x128xf32>, vector<32x128xf32> -> vector<32x128xf32>
    %c0_8 = arith.constant 0 : index
    %c0_9 = arith.constant 0 : index
    %42 = vector.load %arg6[%c0_8, %c0_9] : memref<32x1xf32, #tpu.memory_space<vmem>>, vector<32x1xf32>
    %43 = vector.broadcast %42 : vector<32x1xf32> to vector<32x128xf32>
    %44 = arith.addf %41, %43 : vector<32x128xf32>
    %45 = vector.broadcast %1 : f32 to vector<32x128xf32>
    %46 = arith.mulf %44, %45 : vector<32x128xf32>
    %47 = vector.broadcast %3 : f32 to vector<32x128xf32>
    %48 = arith.subf %46, %47 : vector<32x128xf32>
    %49 = math.tanh %48 : vector<32x128xf32>
    %50 = vector.broadcast %0 : f32 to vector<32x128xf32>
    %51 = arith.mulf %50, %49 : vector<32x128xf32>
    %52 = arith.addf %44, %51 : vector<32x128xf32>
    %c0_10 = arith.constant 0 : index
    %c0_11 = arith.constant 0 : index
    %53 = vector.load %arg7[%c0_10, %c0_11] : memref<32x32xf32, #tpu.memory_space<vmem>>, vector<32x32xf32>
    %cst_12 = arith.constant dense<0.000000e+00> : vector<32x128xf32>
    %54 = tpu.matmul %53, %52, %cst_12 {dimension_numbers = #tpu.dot_dimension_numbers<[1], [0], [0], [1], [0, 0, 1, 1], [], []>} : vector<32x32xf32>, vector<32x128xf32>, vector<32x128xf32> -> vector<32x128xf32>
    %c0_13 = arith.constant 0 : index
    %c0_14 = arith.constant 0 : index
    %55 = vector.load %arg8[%c0_13, %c0_14] : memref<32x1xf32, #tpu.memory_space<vmem>>, vector<32x1xf32>
    %56 = vector.broadcast %55 : vector<32x1xf32> to vector<32x128xf32>
    %57 = arith.addf %54, %56 : vector<32x128xf32>
    %cst_15 = arith.constant 0.000000e+00 : f32
    %58 = vector.broadcast %cst_15 : f32 to vector<32x128xf32>
    %59 = arith.maximumf %57, %58 : vector<32x128xf32>
    %c0_16 = arith.constant 0 : index
    %c0_17 = arith.constant 0 : index
    %60 = vector.load %arg9[%c0_16, %c0_17] : memref<8x32xf32, #tpu.memory_space<vmem>>, vector<8x32xf32>
    %cst_18 = arith.constant dense<0.000000e+00> : vector<8x128xf32>
    %61 = tpu.matmul %60, %59, %cst_18 {dimension_numbers = #tpu.dot_dimension_numbers<[1], [0], [0], [1], [0, 0, 1, 1], [], []>} : vector<8x32xf32>, vector<32x128xf32>, vector<8x128xf32> -> vector<8x128xf32>
    %c0_19 = arith.constant 0 : index
    %c0_20 = arith.constant 0 : index
    %62 = vector.load %arg10[%c0_19, %c0_20] : memref<8x1xf32, #tpu.memory_space<vmem>>, vector<8x1xf32>
    %63 = vector.broadcast %62 : vector<8x1xf32> to vector<8x128xf32>
    %64 = arith.addf %61, %63 : vector<8x128xf32>
    %c0_21 = arith.constant 0 : index
    %c0_22 = arith.constant 0 : index
    %65 = vector.load %arg11[%c0_21, %c0_22] : memref<8x128xf32, #tpu.memory_space<vmem>>, vector<8x128xf32>
    tpu.vector_store %arg11[%c0_21, %c0_22], %64 {strides = array<i32>} : memref<8x128xf32, #tpu.memory_space<vmem>>, vector<8x128xf32>,
    return
  }
  func.func @transform_0(%arg0: i32, %arg1: memref<3xf32, #tpu.memory_space<smem>>) -> (i32, i32) {
    %c0_i32 = arith.constant 0 : i32
    %c0_i32_0 = arith.constant 0 : i32
    return %c0_i32, %arg0 : i32, i32
  }
  func.func @transform_1(%arg0: i32, %arg1: memref<3xf32, #tpu.memory_space<smem>>) -> (i32, i32) {
    %c0_i32 = arith.constant 0 : i32
    %c0_i32_0 = arith.constant 0 : i32
    %c0_i32_1 = arith.constant 0 : i32
    return %c0_i32, %c0_i32_0 : i32, i32
  }
  func.func @transform_2(%arg0: i32, %arg1: memref<3xf32, #tpu.memory_space<smem>>) -> (i32, i32) {
    %c0_i32 = arith.constant 0 : i32
    %c0_i32_0 = arith.constant 0 : i32
    %c0_i32_1 = arith.constant 0 : i32
    return %c0_i32, %c0_i32_0 : i32, i32
  }
  func.func @transform_3(%arg0: i32, %arg1: memref<3xf32, #tpu.memory_space<smem>>) -> (i32, i32) {
    %c0_i32 = arith.constant 0 : i32
    %c0_i32_0 = arith.constant 0 : i32
    %c0_i32_1 = arith.constant 0 : i32
    return %c0_i32, %c0_i32_0 : i32, i32
  }
  func.func @transform_4(%arg0: i32, %arg1: memref<3xf32, #tpu.memory_space<smem>>) -> (i32, i32) {
    %c0_i32 = arith.constant 0 : i32
    %c0_i32_0 = arith.constant 0 : i32
    %c0_i32_1 = arith.constant 0 : i32
    return %c0_i32, %c0_i32_0 : i32, i32
  }
  func.func @transform_5(%arg0: i32, %arg1: memref<3xf32, #tpu.memory_space<smem>>) -> (i32, i32) {
    %c0_i32 = arith.constant 0 : i32
    %c0_i32_0 = arith.constant 0 : i32
    %c0_i32_1 = arith.constant 0 : i32
    return %c0_i32, %c0_i32_0 : i32, i32
  }
  func.func @transform_6(%arg0: i32, %arg1: memref<3xf32, #tpu.memory_space<smem>>) -> (i32, i32) {
    %c0_i32 = arith.constant 0 : i32
    %c0_i32_0 = arith.constant 0 : i32
    %c0_i32_1 = arith.constant 0 : i32
    return %c0_i32, %c0_i32_0 : i32, i32
  }
  func.func @transform_7(%arg0: i32, %arg1: memref<3xf32, #tpu.memory_space<smem>>) -> (i32, i32) {
    %c0_i32 = arith.constant 0 : i32
    %c0_i32_0 = arith.constant 0 : i32
    %c0_i32_1 = arith.constant 0 : i32
    return %c0_i32, %c0_i32_0 : i32, i32
  }
  func.func @transform_8(%arg0: i32, %arg1: memref<3xf32, #tpu.memory_space<smem>>) -> (i32, i32) {
    %c0_i32 = arith.constant 0 : i32
    %c0_i32_0 = arith.constant 0 : i32
    %c0_i32_1 = arith.constant 0 : i32
    return %c0_i32, %c0_i32_0 : i32, i32
  }
  func.func @transform_9(%arg0: i32, %arg1: memref<3xf32, #tpu.memory_space<smem>>) -> (i32, i32) {
    %c0_i32 = arith.constant 0 : i32
    %c0_i32_0 = arith.constant 0 : i32
    return %c0_i32, %arg0 : i32, i32
  }
}

</mosaic_0001>

<llo_original>
// kernel: tpu_custom_call.1
$region0: #{tpu_custom_call.1}
  #allocation0 [shape = 'u32[]', space=smem, size = 0x4, offset = 0x4, fixed_abs, tag = 'smem constant byte address 0x4 - core index']
  #allocation1 [shape = 'u32[144,128]{1,0:T(1,128)}', space=vmem, size = 0x12000, scoped, tag = 'internal scratch']
  #allocation2 [shape = 's32[1]{0}', space=sflag, size = 0x4, scoped, tag = 'scoped memory for tpu_custom_call.1']
  #allocation3 [shape = 'u8[512]{0}', space=smem, size = 0x200, scoped, tag = 'prefetched SMEM operand 0']
  %s0 = inlined_call_operand.vmem [shape: f32[3], index: 0, kind: input, shape index: {}]
  %s1 = inlined_call_operand.vmem [shape: f32[4,128], index: 1, kind: input, shape index: {}]
  %s2 = inlined_call_operand.vmem [shape: f32[32,4], index: 2, kind: input, shape index: {}]
  %s3 = inlined_call_operand.vmem [shape: f32[32,1], index: 3, kind: input, shape index: {}]
  %s4 = inlined_call_operand.vmem [shape: f32[32,32], index: 4, kind: input, shape index: {}]
  %s5 = inlined_call_operand.vmem [shape: f32[32,1], index: 5, kind: input, shape index: {}]
  %s6 = inlined_call_operand.vmem [shape: f32[32,32], index: 6, kind: input, shape index: {}]
  %s7 = inlined_call_operand.vmem [shape: f32[32,1], index: 7, kind: input, shape index: {}]
  %s8 = inlined_call_operand.vmem [shape: f32[8,32], index: 8, kind: input, shape index: {}]
  %s9 = inlined_call_operand.vmem [shape: f32[8,1], index: 9, kind: input, shape index: {}]
  %s10 = inlined_call_operand.hbm [shape: f32[8,128], index: 10, kind: output, shape index: {}]
  %s11 = sld [smem:[#allocation0]]
  $region46: #{tpu_custom_call.1} parent=0
    _
  %s13 = ssub.s32 1, %s11
  %s14 = scalar_select 0, %s13, %s11
  %s15 = sshll.u32 %s0, 4
  %s16 = int_to_ptr.vmem [resolvable:$true] %s15
  %18 = dma.vmem_to_smem %s16, 16, [#allocation3], [#allocation2]
  %19 = dma.done [#allocation2], 16
  %20 = sfence
  $region1: #{tpu_custom_call.1} parent=0
    #allocation4 [shape = 'u8[4096]{0}', space=vmem, size = 0x1000, scoped, tag = 'output window, operand 0, single buffered']
    #allocation5 [shape = 's32[1]{0}', space=sflag, size = 0x4, scoped, tag = 'scoped memory for tpu_custom_call.1']
    %21 = vsyncpa [#allocation5], 0
    // Predicated region
    $region2: #{tpu_custom_call.1} parent=1 // pred_check
      _
    $region3: #{tpu_custom_call.1} parent=1 // pred_check_branch
      %23 = sbr.rel (0) target = $region5
    $region4: #{tpu_custom_call.1} parent=1 // pred_region
      _
    $region5: #{tpu_custom_call.1} parent=1 // pred_fallthru
      _
    // Predicated region
    $region6: #{tpu_custom_call.1} parent=1 // pred_check
      _
    $region7: #{tpu_custom_call.1} parent=1 // pred_check_branch
      %25 = sbr.rel (0) target = $region9
    $region8: #{tpu_custom_call.1} parent=1 // pred_region
      _
    $region9: #{tpu_custom_call.1} parent=1 // pred_fallthru
      _
    // Predicated region
    $region10: #{tpu_custom_call.1} parent=1 // pred_check
      _
    $region11: #{tpu_custom_call.1} parent=1 // pred_check_branch
      %27 = sbr.rel (0) target = $region13
    $region12: #{tpu_custom_call.1} parent=1 // pred_region
      _
    $region13: #{tpu_custom_call.1} parent=1 // pred_fallthru
      _
    // Predicated region
    $region14: #{tpu_custom_call.1} parent=1 // pred_check
      _
    $region15: #{tpu_custom_call.1} parent=1 // pred_check_branch
      %29 = sbr.rel (0) target = $region17
    $region16: #{tpu_custom_call.1} parent=1 // pred_region
      _
    $region17: #{tpu_custom_call.1} parent=1 // pred_fallthru
      _
    // Predicated region
    $region18: #{tpu_custom_call.1} parent=1 // pred_check
      _
    $region19: #{tpu_custom_call.1} parent=1 // pred_check_branch
      %31 = sbr.rel (0) target = $region21
    $region20: #{tpu_custom_call.1} parent=1 // pred_region
      _
    $region21: #{tpu_custom_call.1} parent=1 // pred_fallthru
      _
    // Predicated region
    $region22: #{tpu_custom_call.1} parent=1 // pred_check
      _
    $region23: #{tpu_custom_call.1} parent=1 // pred_check_branch
      %33 = sbr.rel (0) target = $region25
    $region24: #{tpu_custom_call.1} parent=1 // pred_region
      _
    $region25: #{tpu_custom_call.1} parent=1 // pred_fallthru
      _
    // Predicated region
    $region26: #{tpu_custom_call.1} parent=1 // pred_check
      _
    $region27: #{tpu_custom_call.1} parent=1 // pred_check_branch
      %35 = sbr.rel (0) target = $region29
    $region28: #{tpu_custom_call.1} parent=1 // pred_region
      _
    $region29: #{tpu_custom_call.1} parent=1 // pred_fallthru
      _
    // Predicated region
    $region30: #{tpu_custom_call.1} parent=1 // pred_check
      _
    $region31: #{tpu_custom_call.1} parent=1 // pred_check_branch
      %37 = sbr.rel (0) target = $region33
    $region32: #{tpu_custom_call.1} parent=1 // pred_region
      _
    $region33: #{tpu_custom_call.1} parent=1 // pred_fallthru
      _
    // Predicated region
    $region34: #{tpu_custom_call.1} parent=1 // pred_check
      _
    $region35: #{tpu_custom_call.1} parent=1 // pred_check_branch
      %39 = sbr.rel (0) target = $region37
    $region36: #{tpu_custom_call.1} parent=1 // pred_region
      _
    $region37: #{tpu_custom_call.1} parent=1 // pred_fallthru
      _
    %s40 = sld [smem:[#allocation3]]
    %s41 = sld [smem:[#allocation3 + $0x2]]
    %s42 = sld [smem:[#allocation3 + $0x1]]
    %s43 = smul.f32 %s41, %s42
    %v44 = vld [vmem:[%s1] sm:$0xf]
    %v45 = vld [vmem:[%s2] sm:$0xff]
    %v46 = vld [vmem:[%s2 + $0x8] sm:$0xff]
    %v47 = vld [vmem:[%s2 + $0x10] sm:$0xff]
    %v48 = vld [vmem:[%s2 + $0x18] sm:$0xff]
    %v49 = vld [vmem:[%s3] sm:$0xff]
    %v50 = vld [vmem:[%s3 + $0x8] sm:$0xff]
    %v51 = vld [vmem:[%s3 + $0x10] sm:$0xff]
    %v52 = vld [vmem:[%s3 + $0x18] sm:$0xff]
    %54 = vset.pattern.permute.xlu0 0
    %55 = vperm.xlu0 %54, %v45
    %v56 = vpop.permute.xlu0 %55
    %59 = vset.pattern.permute.xlu0 0
    %60 = vperm.xlu0 %59, %v46
    %v61 = vpop.permute.xlu0 %60
    %64 = vset.pattern.permute.xlu0 0
    %65 = vperm.xlu0 %64, %v47
    %v66 = vpop.permute.xlu0 %65
    %69 = vset.pattern.permute.xlu0 0
    %70 = vperm.xlu0 %69, %v48
    %v71 = vpop.permute.xlu0 %70
    %v73 = vlaneseq
    %v74 = vshrl.u32 %v73, 7
    %v75 = vsub.s32 0, %v74
    %v76 = vrot.slane %v44, %v75
    %v77 = vmul.f32 %v56, %v76
    %v78 = vmul.f32 %v61, %v76
    %v79 = vmul.f32 %v66, %v76
    %v80 = vmul.f32 %v71, %v76
    %82 = vset.pattern.permute.xlu0 0
    %83 = vperm.xlu0 %82, %v49
    %v84 = vpop.permute.xlu0 %83
    %87 = vset.pattern.permute.xlu0 0
    %88 = vperm.xlu0 %87, %v50
    %v89 = vpop.permute.xlu0 %88
    %92 = vset.pattern.permute.xlu0 0
    %93 = vperm.xlu0 %92, %v51
    %v94 = vpop.permute.xlu0 %93
    %97 = vset.pattern.permute.xlu0 0
    %98 = vperm.xlu0 %97, %v52
    %v99 = vpop.permute.xlu0 %98
    %v101 = vadd.f32 %v84, %v77
    %v102 = vadd.f32 %v89, %v78
    %v103 = vadd.f32 %v94, %v79
    %v104 = vadd.f32 %v99, %v80
    %105 = vset.pattern.permute.xlu0 1
    %106 = vperm.xlu0 %105, %v45
    %v107 = vpop.permute.xlu0 %106
    %109 = vset.pattern.permute.xlu0 1
    %110 = vperm.xlu0 %109, %v46
    %v111 = vpop.permute.xlu0 %110
    %113 = vset.pattern.permute.xlu0 1
    %114 = vperm.xlu0 %113, %v47
    %v115 = vpop.permute.xlu0 %114
    %117 = vset.pattern.permute.xlu0 1
    %118 = vperm.xlu0 %117, %v48
    %v119 = vpop.permute.xlu0 %118
    %v121 = vlaneseq
    %v122 = vshrl.u32 %v121, 7
    %v123 = vsub.s32 1, %v122
    %v124 = vrot.slane %v44, %v123
    %v125 = vmul.f32 %v107, %v124
    %v126 = vmul.f32 %v111, %v124
    %v127 = vmul.f32 %v115, %v124
    %v128 = vmul.f32 %v119, %v124
    %v129 = vadd.f32 %v101, %v125
    %v130 = vadd.f32 %v102, %v126
    %v131 = vadd.f32 %v103, %v127
    %v132 = vadd.f32 %v104, %v128
    %133 = vset.pattern.permute.xlu0 2
    %134 = vperm.xlu0 %133, %v45
    %v135 = vpop.permute.xlu0 %134
    %137 = vset.pattern.permute.xlu0 2
    %138 = vperm.xlu0 %137, %v46
    %v139 = vpop.permute.xlu0 %138
    %141 = vset.pattern.permute.xlu0 2
    %142 = vperm.xlu0 %141, %v47
    %v143 = vpop.permute.xlu0 %142
    %145 = vset.pattern.permute.xlu0 2
    %146 = vperm.xlu0 %145, %v48
    %v147 = vpop.permute.xlu0 %146
    %v149 = vlaneseq
    %v150 = vshrl.u32 %v149, 7
    %v151 = vsub.s32 2, %v150
    %v152 = vrot.slane %v44, %v151
    %v153 = vmul.f32 %v135, %v152
    %v154 = vmul.f32 %v139, %v152
    %v155 = vmul.f32 %v143, %v152
    %v156 = vmul.f32 %v147, %v152
    %v157 = vadd.f32 %v129, %v153
    %v158 = vadd.f32 %v130, %v154
    %v159 = vadd.f32 %v131, %v155
    %v160 = vadd.f32 %v132, %v156
    %161 = vset.pattern.permute.xlu0 3
    %162 = vperm.xlu0 %161, %v45
    %v163 = vpop.permute.xlu0 %162
    %165 = vset.pattern.permute.xlu0 3
    %166 = vperm.xlu0 %165, %v46
    %v167 = vpop.permute.xlu0 %166
    %169 = vset.pattern.permute.xlu0 3
    %170 = vperm.xlu0 %169, %v47
    %v171 = vpop.permute.xlu0 %170
    %173 = vset.pattern.permute.xlu0 3
    %174 = vperm.xlu0 %173, %v48
    %v175 = vpop.permute.xlu0 %174
    %v177 = vlaneseq
    %v178 = vshrl.u32 %v177, 7
    %v179 = vsub.s32 3, %v178
    %v180 = vrot.slane %v44, %v179
    %v181 = vmul.f32 %v163, %v180
    %v182 = vmul.f32 %v167, %v180
    %v183 = vmul.f32 %v171, %v180
    %v184 = vmul.f32 %v175, %v180
    %v185 = vadd.f32 %v157, %v181
    %v186 = vadd.f32 %v158, %v182
    %v187 = vadd.f32 %v159, %v183
    %v188 = vadd.f32 %v160, %v184
    %v189 = vstv %s41
    %v190 = vmul.f32 %v185, %v189
    %v191 = vmul.f32 %v186, %v189
    %v192 = vmul.f32 %v187, %v189
    %v193 = vmul.f32 %v188, %v189
    %v194 = vstv %s43
    %v195 = vsub.f32 %v190, %v194
    %v196 = vsub.f32 %v191, %v194
    %v197 = vsub.f32 %v192, %v194
    %v198 = vsub.f32 %v193, %v194
    %v199 = vtanh.pop %v195
    %v200 = vtanh.pop %v196
    %v201 = vtanh.pop %v197
    %v202 = vtanh.pop %v198
    %v203 = vstv %s40
    %v204 = vmul.f32 %v203, %v199
    %v205 = vmul.f32 %v203, %v200
    %v206 = vmul.f32 %v203, %v201
    %v207 = vmul.f32 %v203, %v202
    %v208 = vadd.f32 %v185, %v204
    %v209 = vadd.f32 %v186, %v205
    %v210 = vadd.f32 %v187, %v206
    %v211 = vadd.f32 %v188, %v207
    %v212 = vld [vmem:[%s4] sm:$0xff]
    %v213 = vld [vmem:[%s4 + $0x8] sm:$0xff]
    %v214 = vld [vmem:[%s4 + $0x10] sm:$0xff]
    %v215 = vld [vmem:[%s4 + $0x18] sm:$0xff]
    %v216 = vld [vmem:[%s5] sm:$0xff]
    %v217 = vld [vmem:[%s5 + $0x8] sm:$0xff]
    %v218 = vld [vmem:[%s5 + $0x10] sm:$0xff]
    %v219 = vld [vmem:[%s5 + $0x18] sm:$0xff]
    %221 = vset.pattern.permute.xlu0 0
    %222 = vperm.xlu0 %221, %v216
    %v223 = vpop.permute.xlu0 %222
    %226 = vset.pattern.permute.xlu0 0
    %227 = vperm.xlu0 %226, %v217
    %v228 = vpop.permute.xlu0 %227
    %231 = vset.pattern.permute.xlu0 0
    %232 = vperm.xlu0 %231, %v218
    %v233 = vpop.permute.xlu0 %232
    %236 = vset.pattern.permute.xlu0 0
    %237 = vperm.xlu0 %236, %v219
    %v238 = vpop.permute.xlu0 %237
    %vm240 = vcmask 261120
    %v242 = vsel %vm240, %v212, 0
    %v245 = vsel %vm240, %v213, 0
    %v248 = vsel %vm240, %v214, 0
    %v251 = vsel %vm240, %v215, 0
    %253 = vmatprep.subr.mxu0 0.0
    %254 = vmatpush1.msra.mxu0 0.0
    %255 = vmatprep.subr.mxu0 0.0
    %256 = vmatpush1.msra.mxu0 0.0
    %257 = vmatprep.subr.mxu0 0.0
    %258 = vmatpush1.msra.mxu0 0.0
    %259 = vmatprep.subr.mxu0 0.0
    %260 = vmatpush1.msra.mxu0 0.0
    %261 = vmatprep.subr.mxu0 0.0
    %262 = vmatpush1.msra.mxu0 0.0
    %263 = vmatprep.subr.mxu0 0.0
    %264 = vmatpush1.msra.mxu0 0.0
    %265 = vmatprep.subr.mxu0 0.0
    %266 = vmatpush1.msra.mxu0 0.0
    %267 = vmatprep.subr.mxu0 0.0
    %268 = vmatpush1.msra.mxu0 0.0
    %269 = vmatprep.subr.mxu0 0.0
    %270 = vmatpush1.msra.mxu0 0.0
    %271 = vmatprep.subr.mxu0 0.0
    %272 = vmatpush1.msra.mxu0 0.0
    %273 = vmatprep.subr.mxu0 0.0
    %274 = vmatpush1.msra.mxu0 0.0
    %275 = vmatprep.subr.mxu0 0.0
    %276 = vmatpush1.msra.mxu0 0.0
    %277 = vmatprep.subr.mxu0 0.0
    %278 = vmatpush1.msra.mxu0 %v211
    %279 = vmatprep.subr.mxu0 0.0
    %280 = vmatpush1.msra.mxu0 %v210
    %281 = vmatprep.subr.mxu0 0.0
    %282 = vmatpush1.msra.mxu0 %v209
    %283 = vmatprep.subr.mxu0 0.0
    %284 = vmatpush1.msra.mxu0 %v208
    %285 = vmatprep.subr.mxu0 0.0
    %286 = vmatpush2.msra.mxu0 0.0
    %287 = vmatprep.subr.mxu0 0.0
    %288 = vmatpush2.msra.mxu0 0.0
    %289 = vmatprep.subr.mxu0 0.0
    %290 = vmatpush2.msra.mxu0 0.0
    %291 = vmatprep.subr.mxu0 0.0
    %292 = vmatpush2.msra.mxu0 0.0
    %293 = vmatprep.subr.mxu0 0.0
    %294 = vmatpush2.msra.mxu0 0.0
    %295 = vmatprep.subr.mxu0 0.0
    %296 = vmatpush2.msra.mxu0 0.0
    %297 = vmatprep.subr.mxu0 0.0
    %298 = vmatpush2.msra.mxu0 0.0
    %299 = vmatprep.subr.mxu0 0.0
    %300 = vmatpush2.msra.mxu0 0.0
    %301 = vmatprep.subr.mxu0 0.0
    %302 = vmatpush2.msra.mxu0 0.0
    %303 = vmatprep.subr.mxu0 0.0
    %304 = vmatpush2.msra.mxu0 0.0
    %305 = vmatprep.subr.mxu0 0.0
    %306 = vmatpush2.msra.mxu0 0.0
    %307 = vmatprep.subr.mxu0 0.0
    %308 = vmatpush2.msra.mxu0 0.0
    %309 = vmatprep.subr.mxu0 0.0
    %310 = vmatpush2.msra.mxu0 0.0
    %311 = vmatprep.subr.mxu0 0.0
    %312 = vmatpush2.msra.mxu0 0.0
    %313 = vmatprep.subr.mxu0 0.0
    %314 = vmatpush2.msra.mxu0 0.0
    %315 = vmatprep.subr.mxu0 0.0
    %316 = vmatpush2.msra.mxu0 0.0
    %317 = vmatprep.mubr.f32.mxu0 0.0
    %318 = vmatmul.mubr.f32.gmra.mxu0 %v242
    %v319 = vpop.f32.mrf.mxu0
    %v320 = vadd.f32 %v223, %v319
    %v321 = vpop.f32.mrf.mxu0
    %322 = vmatprep.mubr.f32.mxu0 0.0
    %323 = vmatmul.mubr.f32.gmra.mxu0 %v245
    %v324 = vpop.f32.mrf.mxu0
    %v325 = vadd.f32 %v228, %v324
    %v326 = vpop.f32.mrf.mxu0
    %327 = vmatprep.mubr.f32.mxu0 0.0
    %328 = vmatmul.mubr.f32.gmra.mxu0 %v248
    %v329 = vpop.f32.mrf.mxu0
    %v330 = vadd.f32 %v233, %v329
    %v331 = vpop.f32.mrf.mxu0
    %332 = vmatprep.mubr.f32.mxu0 0.0
    %333 = vmatmul.mubr.f32.gmra.mxu0 %v251
    %v334 = vpop.f32.mrf.mxu0
    %v335 = vadd.f32 %v238, %v334
    %v336 = vpop.f32.mrf.mxu0
    %337 = vdwg.mxu0
    %v338 = vmul.f32 %v320, %v189
    %v339 = vmul.f32 %v325, %v189
    %v340 = vmul.f32 %v330, %v189
    %v341 = vmul.f32 %v335, %v189
    %v342 = vsub.f32 %v338, %v194
    %v343 = vsub.f32 %v339, %v194
    %v344 = vsub.f32 %v340, %v194
    %v345 = vsub.f32 %v341, %v194
    %v346 = vtanh.pop %v342
    %v347 = vtanh.pop %v343
    %v348 = vtanh.pop %v344
    %v349 = vtanh.pop %v345
    %v350 = vmul.f32 %v203, %v346
    %v351 = vmul.f32 %v203, %v347
    %v352 = vmul.f32 %v203, %v348
    %v353 = vmul.f32 %v203, %v349
    %v354 = vadd.f32 %v320, %v350
    %v355 = vadd.f32 %v325, %v351
    %v356 = vadd.f32 %v330, %v352
    %v357 = vadd.f32 %v335, %v353
    %v358 = vld [vmem:[%s6] sm:$0xff]
    %v359 = vld [vmem:[%s6 + $0x8] sm:$0xff]
    %v360 = vld [vmem:[%s6 + $0x10] sm:$0xff]
    %v361 = vld [vmem:[%s6 + $0x18] sm:$0xff]
    %v362 = vld [vmem:[%s7] sm:$0xff]
    %v363 = vld [vmem:[%s7 + $0x8] sm:$0xff]
    %v364 = vld [vmem:[%s7 + $0x10] sm:$0xff]
    %v365 = vld [vmem:[%s7 + $0x18] sm:$0xff]
    %367 = vset.pattern.permute.xlu0 0
    %368 = vperm.xlu0 %367, %v362
    %v369 = vpop.permute.xlu0 %368
    %372 = vset.pattern.permute.xlu0 0
    %373 = vperm.xlu0 %372, %v363
    %v374 = vpop.permute.xlu0 %373
    %377 = vset.pattern.permute.xlu0 0
    %378 = vperm.xlu0 %377, %v364
    %v379 = vpop.permute.xlu0 %378
    %382 = vset.pattern.permute.xlu0 0
    %383 = vperm.xlu0 %382, %v365
    %v384 = vpop.permute.xlu0 %383
    %v387 = vsel %vm240, %v358, 0
    %v390 = vsel %vm240, %v359, 0
    %v393 = vsel %vm240, %v360, 0
    %v396 = vsel %vm240, %v361, 0
    %398 = vmatprep.subr.mxu0 0.0
    %399 = vmatpush1.msra.mxu0 0.0
    %400 = vmatprep.subr.mxu0 0.0
    %401 = vmatpush1.msra.mxu0 0.0
    %402 = vmatprep.subr.mxu0 0.0
    %403 = vmatpush1.msra.mxu0 0.0
    %404 = vmatprep.subr.mxu0 0.0
    %405 = vmatpush1.msra.mxu0 0.0
    %406 = vmatprep.subr.mxu0 0.0
    %407 = vmatpush1.msra.mxu0 0.0
    %408 = vmatprep.subr.mxu0 0.0
    %409 = vmatpush1.msra.mxu0 0.0
    %410 = vmatprep.subr.mxu0 0.0
    %411 = vmatpush1.msra.mxu0 0.0
    %412 = vmatprep.subr.mxu0 0.0
    %413 = vmatpush1.msra.mxu0 0.0
    %414 = vmatprep.subr.mxu0 0.0
    %415 = vmatpush1.msra.mxu0 0.0
    %416 = vmatprep.subr.mxu0 0.0
    %417 = vmatpush1.msra.mxu0 0.0
    %418 = vmatprep.subr.mxu0 0.0
    %419 = vmatpush1.msra.mxu0 0.0
    %420 = vmatprep.subr.mxu0 0.0
    %421 = vmatpush1.msra.mxu0 0.0
    %422 = vmatprep.subr.mxu0 0.0
    %423 = vmatpush1.msra.mxu0 %v357
    %424 = vmatprep.subr.mxu0 0.0
    %425 = vmatpush1.msra.mxu0 %v356
    %426 = vmatprep.subr.mxu0 0.0
    %427 = vmatpush1.msra.mxu0 %v355
    %428 = vmatprep.subr.mxu0 0.0
    %429 = vmatpush1.msra.mxu0 %v354
    %430 = vmatprep.subr.mxu0 0.0
    %431 = vmatpush2.msra.mxu0 0.0
    %432 = vmatprep.subr.mxu0 0.0
    %433 = vmatpush2.msra.mxu0 0.0
    %434 = vmatprep.subr.mxu0 0.0
    %435 = vmatpush2.msra.mxu0 0.0
    %436 = vmatprep.subr.mxu0 0.0
    %437 = vmatpush2.msra.mxu0 0.0
    %438 = vmatprep.subr.mxu0 0.0
    %439 = vmatpush2.msra.mxu0 0.0
    %440 = vmatprep.subr.mxu0 0.0
    %441 = vmatpush2.msra.mxu0 0.0
    %442 = vmatprep.subr.mxu0 0.0
    %443 = vmatpush2.msra.mxu0 0.0
    %444 = vmatprep.subr.mxu0 0.0
    %445 = vmatpush2.msra.mxu0 0.0
    %446 = vmatprep.subr.mxu0 0.0
    %447 = vmatpush2.msra.mxu0 0.0
    %448 = vmatprep.subr.mxu0 0.0
    %449 = vmatpush2.msra.mxu0 0.0
    %450 = vmatprep.subr.mxu0 0.0
    %451 = vmatpush2.msra.mxu0 0.0
    %452 = vmatprep.subr.mxu0 0.0
    %453 = vmatpush2.msra.mxu0 0.0
    %454 = vmatprep.subr.mxu0 0.0
    %455 = vmatpush2.msra.mxu0 0.0
    %456 = vmatprep.subr.mxu0 0.0
    %457 = vmatpush2.msra.mxu0 0.0
    %458 = vmatprep.subr.mxu0 0.0
    %459 = vmatpush2.msra.mxu0 0.0
    %460 = vmatprep.subr.mxu0 0.0
    %461 = vmatpush2.msra.mxu0 0.0
    %462 = vmatprep.mubr.f32.mxu0 0.0
    %463 = vmatmul.mubr.f32.gmra.mxu0 %v387
    %v464 = vpop.f32.mrf.mxu0
    %v465 = vadd.f32 %v369, %v464
    %v466 = vpop.f32.mrf.mxu0
    %467 = vmatprep.mubr.f32.mxu0 0.0
    %468 = vmatmul.mubr.f32.gmra.mxu0 %v390
    %v469 = vpop.f32.mrf.mxu0
    %v470 = vadd.f32 %v374, %v469
    %v471 = vpop.f32.mrf.mxu0
    %472 = vmatprep.mubr.f32.mxu0 0.0
    %473 = vmatmul.mubr.f32.gmra.mxu0 %v393
    %v474 = vpop.f32.mrf.mxu0
    %v475 = vadd.f32 %v379, %v474
    %v476 = vpop.f32.mrf.mxu0
    %477 = vmatprep.mubr.f32.mxu0 0.0
    %478 = vmatmul.mubr.f32.gmra.mxu0 %v396
    %v479 = vpop.f32.mrf.mxu0
    %v480 = vadd.f32 %v384, %v479
    %v481 = vpop.f32.mrf.mxu0
    %482 = vdwg.mxu0
    %v483 = vmax.f32 %v465, 0.0
    %v484 = vmax.f32 %v470, 0.0
    %v485 = vmax.f32 %v475, 0.0
    %v486 = vmax.f32 %v480, 0.0
    %v487 = vld [vmem:[%s8] sm:$0xff]
    %v488 = vld [vmem:[%s9] sm:$0xff]
    %490 = vset.pattern.permute.xlu0 0
    %491 = vperm.xlu0 %490, %v488
    %v492 = vpop.permute.xlu0 %491
    %v495 = vsel %vm240, %v487, 0
    %497 = vmatprep.subr.mxu0 0.0
    %498 = vmatpush1.msra.mxu0 0.0
    %499 = vmatprep.subr.mxu0 0.0
    %500 = vmatpush1.msra.mxu0 0.0
    %501 = vmatprep.subr.mxu0 0.0
    %502 = vmatpush1.msra.mxu0 0.0
    %503 = vmatprep.subr.mxu0 0.0
    %504 = vmatpush1.msra.mxu0 0.0
    %505 = vmatprep.subr.mxu0 0.0
    %506 = vmatpush1.msra.mxu0 0.0
    %507 = vmatprep.subr.mxu0 0.0
    %508 = vmatpush1.msra.mxu0 0.0
    %509 = vmatprep.subr.mxu0 0.0
    %510 = vmatpush1.msra.mxu0 0.0
    %511 = vmatprep.subr.mxu0 0.0
    %512 = vmatpush1.msra.mxu0 0.0
    %513 = vmatprep.subr.mxu0 0.0
    %514 = vmatpush1.msra.mxu0 0.0
    %515 = vmatprep.subr.mxu0 0.0
    %516 = vmatpush1.msra.mxu0 0.0
    %517 = vmatprep.subr.mxu0 0.0
    %518 = vmatpush1.msra.mxu0 0.0
    %519 = vmatprep.subr.mxu0 0.0
    %520 = vmatpush1.msra.mxu0 0.0
    %521 = vmatprep.subr.mxu0 0.0
    %522 = vmatpush1.msra.mxu0 %v486
    %523 = vmatprep.subr.mxu0 0.0
    %524 = vmatpush1.msra.mxu0 %v485
    %525 = vmatprep.subr.mxu0 0.0
    %526 = vmatpush1.msra.mxu0 %v484
    %527 = vmatprep.subr.mxu0 0.0
    %528 = vmatpush1.msra.mxu0 %v483
    %529 = vmatprep.subr.mxu0 0.0
    %530 = vmatpush2.msra.mxu0 0.0
    %531 = vmatprep.subr.mxu0 0.0
    %532 = vmatpush2.msra.mxu0 0.0
    %533 = vmatprep.subr.mxu0 0.0
    %534 = vmatpush2.msra.mxu0 0.0
    %535 = vmatprep.subr.mxu0 0.0
    %536 = vmatpush2.msra.mxu0 0.0
    %537 = vmatprep.subr.mxu0 0.0
    %538 = vmatpush2.msra.mxu0 0.0
    %539 = vmatprep.subr.mxu0 0.0
    %540 = vmatpush2.msra.mxu0 0.0
    %541 = vmatprep.subr.mxu0 0.0
    %542 = vmatpush2.msra.mxu0 0.0
    %543 = vmatprep.subr.mxu0 0.0
    %544 = vmatpush2.msra.mxu0 0.0
    %545 = vmatprep.subr.mxu0 0.0
    %546 = vmatpush2.msra.mxu0 0.0
    %547 = vmatprep.subr.mxu0 0.0
    %548 = vmatpush2.msra.mxu0 0.0
    %549 = vmatprep.subr.mxu0 0.0
    %550 = vmatpush2.msra.mxu0 0.0
    %551 = vmatprep.subr.mxu0 0.0
    %552 = vmatpush2.msra.mxu0 0.0
    %553 = vmatprep.subr.mxu0 0.0
    %554 = vmatpush2.msra.mxu0 0.0
    %555 = vmatprep.subr.mxu0 0.0
    %556 = vmatpush2.msra.mxu0 0.0
    %557 = vmatprep.subr.mxu0 0.0
    %558 = vmatpush2.msra.mxu0 0.0
    %559 = vmatprep.subr.mxu0 0.0
    %560 = vmatpush2.msra.mxu0 0.0
    %561 = vmatprep.mubr.f32.mxu0 0.0
    %562 = vmatmul.mubr.f32.gmra.mxu0 %v495
    %v563 = vpop.f32.mrf.mxu0
    %v564 = vadd.f32 %v492, %v563
    %v565 = vpop.f32.mrf.mxu0
    %566 = vdwg.mxu0
    %567 = vst [vmem:[#allocation4] sm:$0xff] %v564
    // Predicated region
    $region38: #{tpu_custom_call.1} parent=1 // pred_check
      _
    $region39: #{tpu_custom_call.1} parent=1 // pred_check_branch
      %569 = sbr.rel (0) target = $region41
    $region40: #{tpu_custom_call.1} parent=1 // pred_region
      %s571 = ssub.s32 128, 128
      %572 = vsyncadd [#allocation5], %s571
      %s574 = sshll.u32 [#allocation4], 4
      %s575 = int_to_ptr.vmem [resolvable:$true] %s574
      %577 = dma.vmem_to_hbm [thread:$0]  %s575, 128, %s10, [#allocation5]
    $region41: #{tpu_custom_call.1} parent=1 // pred_fallthru
      _
    // Predicated region
    $region42: #{tpu_custom_call.1} parent=1 // pred_check
      _
    $region43: #{tpu_custom_call.1} parent=1 // pred_check_branch
      %579 = sbr.rel (0) target = $region45
    $region44: #{tpu_custom_call.1} parent=1 // pred_region
      %580 = dma.done [#allocation5], 128
    $region45: #{tpu_custom_call.1} parent=1 // pred_fallthru
      _
    %581 = vsyncpa [#allocation5], 1

</llo_original>
